<compile_context>
chip_gen: v5e
topology: v5e:2x2
jax: 0.10.0
libtpu: 0.0.40
codegen_flags: <defaults>
</compile_context>

<pallas_src>
import math
import functools

import jax
import jax.numpy as jnp
from jax.experimental import pallas as pl
from jax.experimental.pallas import tpu as pltpu


# --------------------------- generation helpers ------------------------------
def _device_kind():
    try:
        return jax.devices()[0].device_kind.lower()
    except Exception:
        return ""


@functools.lru_cache(maxsize=None)
def _vmem_limit_bytes():
    """Explicit scoped-VMEM limit: 3/4 of physical VMEM, capped at 100 MiB.
    (Physical: 128 MiB v5e/v6e, 64 MiB v7x; scoped defaults are much lower.)"""
    try:
        cap = pltpu.get_tpu_info().vmem_capacity_bytes
    except Exception:
        cap = 64 * 1024 * 1024          # conservative (v7x-sized) fallback
    return int(min(cap * 3 // 4, 100 * 1024 * 1024))


@functools.lru_cache(maxsize=None)
def _softmax_exp_dtype():
    """bf16 exp on v6e/v7x (bf16 EUP ~2x throughput; exp is the binding slot
    for dk <= 128); keep f32 elsewhere (v5e has no bf16 EUP path)."""
    kind = _device_kind()
    if ("v6" in kind) or ("v7" in kind):
        return jnp.bfloat16
    return jnp.float32


def _pick_tile(dim, preferred, align):
    """Largest tile <= `preferred` that divides `dim` and is a multiple of
    `align`; falls back to the full dimension (always a legal block size)."""
    if dim <= preferred:
        return dim
    t = (preferred // align) * align
    while t >= align:
        if dim % t == 0:
            return t
        t -= align
    # TODO(synk): for awkward, non-divisible dims use a pl.cdiv grid with a
    # masked tail instead of a (potentially VMEM-blowing) full-dim block.
    return dim


# ----------------------- Tiled linear (x @ W + b) kernel ---------------------
def _linear_kernel(x_ref, w_ref, b_ref, o_ref, acc_ref):
    k = pl.program_id(2)

    @pl.when(k == 0)
    def _init():
        acc_ref[...] = jnp.zeros_like(acc_ref)

    # bf16 MXU operands (weights are already bf16 in HBM), f32 accumulation.
    acc_ref[...] += jnp.dot(
        x_ref[...].astype(jnp.bfloat16),
        w_ref[...].astype(jnp.bfloat16),
        preferred_element_type=jnp.float32,
    )

    @pl.when(k == pl.num_programs(2) - 1)
    def _finalize():
        o_ref[...] = (acc_ref[...] + b_ref[...]).astype(o_ref.dtype)


def pallas_linear(x2d, w, b, *, out_dtype=jnp.float32,
                  tm_pref=1024, tn_pref=512, tk_pref=512):
    """x2d: (N, Din) @ w: (Din, Dout) + b: (Dout,) -> (N, Dout) in out_dtype.
    Weights are expected pre-cast to bf16 (kept bf16 in HBM)."""
    N, Din = x2d.shape
    Dout = w.shape[1]
    tm = _pick_tile(N, tm_pref, 8)
    tn = _pick_tile(Dout, tn_pref, 128)
    tk = _pick_tile(Din, tk_pref, 128)
    b2d = b.reshape(1, Dout)
    return pl.pallas_call(
        _linear_kernel,
        out_shape=jax.ShapeDtypeStruct((N, Dout), out_dtype),
        grid=(N // tm, Dout // tn, Din // tk),
        in_specs=[
            pl.BlockSpec((tm, tk), lambda i, j, k: (i, k)),
            pl.BlockSpec((tk, tn), lambda i, j, k: (k, j)),
            pl.BlockSpec((1, tn), lambda i, j, k: (0, j)),
        ],
        out_specs=pl.BlockSpec((tm, tn), lambda i, j, k: (i, j)),
        scratch_shapes=[pltpu.VMEM((tm, tn), jnp.float32)],
        compiler_params=pltpu.CompilerParams(
            dimension_semantics=("parallel", "parallel", "arbitrary"),
            vmem_limit_bytes=_vmem_limit_bytes()),
    )(x2d, w, b2d)


# ----------------------- Flash-style attention kernel ------------------------
def _flash_head_kernel(q_ref, k_ref, v_ref, o_ref, m_sc, l_sc, acc_sc,
                       *, bias_ref=None, exp_dtype=jnp.float32):
    """One (batch, head, q-block) tile; grid axis 3 iterates over key blocks.

      q_ref : (tq, dk) bf16   (Q already scaled by 1/sqrt(dk) via weights)
      k_ref : (tk, dk) bf16
      v_ref : (tk, dk) bf16
      bias  : (1, tk)  f32 additive key mask (0 keep / -1e30 masked), optional
      o_ref : (tq, dk) bf16
      scratch: m_sc, l_sc (tq, 1) f32; acc_sc (tq, dk) f32
    """
    kb = pl.program_id(3)

    @pl.when(kb == 0)
    def _init():
        m_sc[...] = jnp.full_like(m_sc, -1e30)
        l_sc[...] = jnp.zeros_like(l_sc)
        acc_sc[...] = jnp.zeros_like(acc_sc)

    # scores (tq, tk) = q @ k^T: dk contracted on the MXU, f32 accumulation,
    # no explicit K transpose.
    s = jax.lax.dot_general(q_ref[...], k_ref[...],
                            (((1,), (1,)), ((), ())),
                            preferred_element_type=jnp.float32)
    if bias_ref is not None:
        s = s + bias_ref[...]                              # (1, tk) broadcasts

    m_prev = m_sc[...]
    m_new = jnp.maximum(m_prev, jnp.max(s, axis=-1, keepdims=True))
    alpha = jnp.exp(m_prev - m_new)
    # exp in exp_dtype: bf16 on v6e/v7x halves the EUP cost of the softmax.
    p = jnp.exp((s - m_new).astype(exp_dtype))
    l_sc[...] = alpha * l_sc[...] + jnp.sum(p, axis=-1, keepdims=True,
                                            dtype=jnp.float32)
    acc_sc[...] = alpha * acc_sc[...] + jax.lax.dot_general(
        p.astype(jnp.bfloat16), v_ref[...],
        (((1,), (0,)), ((), ())),
        preferred_element_type=jnp.float32)
    m_sc[...] = m_new

    @pl.when(kb == pl.num_programs(3) - 1)
    def _finalize():
        # Finalize is only scale + cast (no per-head concatenate). Exact
        # reciprocal: finalize-only, so its cost is irrelevant.
        o_ref[...] = (acc_sc[...] * pl.reciprocal(l_sc[...], approx=False)
                      ).astype(o_ref.dtype)
    # TODO(synk): for dk < 128, pack 2-4 heads per MXU pass (block-diagonal
    # layout) to restore MXU/vreg occupancy; not implemented here.


def _flash_head_kernel_bias(bias_ref, q_ref, k_ref, v_ref, o_ref,
                            m_sc, l_sc, acc_sc, *, exp_dtype):
    _flash_head_kernel(q_ref, k_ref, v_ref, o_ref, m_sc, l_sc, acc_sc,
                       bias_ref=bias_ref, exp_dtype=exp_dtype)


def _attention_pallas_call(args, in_specs, out_shape, out_spec, grid,
                           kernel, tq, dk):
    return pl.pallas_call(
        kernel,
        out_shape=out_shape,
        grid=grid,
        in_specs=in_specs,
        out_specs=out_spec,
        scratch_shapes=[
            pltpu.VMEM((tq, 1), jnp.float32),    # running max
            pltpu.VMEM((tq, 1), jnp.float32),    # running denominator
            pltpu.VMEM((tq, dk), jnp.float32),   # f32 output accumulator
        ],
        # TODO(synk): if profiling shows exposed K/V DMA at small dk, add
        # pipeline_mode=pl.Buffered(3) on the K/V specs.
        compiler_params=pltpu.CompilerParams(
            dimension_semantics=("parallel", "parallel", "parallel",
                                 "arbitrary"),
            vmem_limit_bytes=_vmem_limit_bytes()),
    )(*args)


_HEAD_SLICED_LAYOUT_OK = True   # flipped to False once if the probe fails


def pallas_mha_attention(bias, *, qkv=None, q=None, k=None, v=None,
                         tq_pref=512, tk_pref=512):
    """Flash attention, one (batch, head, q-block) tile per program.

    Inputs (bf16; Q pre-scaled by 1/sqrt(dk) through its projection weights):
      * self-attention : qkv  (B, S, 3, H, dk) — fused projection output,
                         indexed in place (no XLA stack/transpose round trip).
      * cross-attention: q, k, v each (B, S, H, dk) (free reshapes of the
                         per-tensor projections).
      * bias: (B, 1, S) f32 additive key mask, or None (specialized kernel
        without a bias stream).

    Returns the attention context as (B, S, H*dk) bf16.
    """
    global _HEAD_SLICED_LAYOUT_OK
    fused = qkv is not None
    if fused:
        B, S, _, H, dk = qkv.shape
    else:
        B, S, H, dk = q.shape
    tq = _pick_tile(S, tq_pref, 8)
    tk = _pick_tile(S, tk_pref, 128)
    grid = (B, H, S // tq, S // tk)

    exp_dtype = _softmax_exp_dtype()
    if bias is None:
        kernel = functools.partial(_flash_head_kernel, exp_dtype=exp_dtype)
        bias_args, bias_specs = (), ()
    else:
        kernel = functools.partial(_flash_head_kernel_bias, exp_dtype=exp_dtype)
        bias_args = (bias,)
        bias_specs = (pl.BlockSpec((None, 1, tk),
                                   lambda b, h, i, j: (b, 0, j)),)

    def head_sliced_call():
        # Per-head blocks sliced straight out of the projection layout
        # (B, S, [3,] H, dk): no HBM-level transpose at all.
        if fused:
            q_spec = pl.BlockSpec((None, tq, None, None, dk),
                                  lambda b, h, i, j: (b, i, 0, h, 0))
            k_spec = pl.BlockSpec((None, tk, None, None, dk),
                                  lambda b, h, i, j: (b, j, 1, h, 0))
            v_spec = pl.BlockSpec((None, tk, None, None, dk),
                                  lambda b, h, i, j: (b, j, 2, h, 0))
            qkv_args = (qkv, qkv, qkv)
        else:
            q_spec = pl.BlockSpec((None, tq, None, dk),
                                  lambda b, h, i, j: (b, i, h, 0))
            k_spec = pl.BlockSpec((None, tk, None, dk),
                                  lambda b, h, i, j: (b, j, h, 0))
            v_spec = pl.BlockSpec((None, tk, None, dk),
                                  lambda b, h, i, j: (b, j, h, 0))
            qkv_args = (q, k, v)
        out = _attention_pallas_call(
            bias_args + qkv_args,
            list(bias_specs) + [q_spec, k_spec, v_spec],
            jax.ShapeDtypeStruct((B, S, H, dk), jnp.bfloat16),
            pl.BlockSpec((None, tq, None, dk), lambda b, h, i, j: (b, i, h, 0)),
            grid, kernel, tq, dk)
        return out.reshape(B, S, H * dk)

    def transposed_call():
        # Fallback: one extra HBM round trip to a canonical (B*H, S, dk)
        # layout; same kernel body, fully (8,128)-canonical blocks.
        if fused:
            qkv_t = qkv.transpose(2, 0, 3, 1, 4).reshape(3, B * H, S, dk)
            q_spec = pl.BlockSpec((None, None, tq, dk),
                                  lambda b, h, i, j: (0, b * H + h, i, 0))
            k_spec = pl.BlockSpec((None, None, tk, dk),
                                  lambda b, h, i, j: (1, b * H + h, j, 0))
            v_spec = pl.BlockSpec((None, None, tk, dk),
                                  lambda b, h, i, j: (2, b * H + h, j, 0))
            qkv_args = (qkv_t, qkv_t, qkv_t)
        else:
            def to_bh(x):
                return x.transpose(0, 2, 1, 3).reshape(B * H, S, dk)
            q_t, k_t, v_t = to_bh(q), to_bh(k), to_bh(v)
            q_spec = pl.BlockSpec((None, tq, dk),
                                  lambda b, h, i, j: (b * H + h, i, 0))
            k_spec = pl.BlockSpec((None, tk, dk),
                                  lambda b, h, i, j: (b * H + h, j, 0))
            v_spec = pl.BlockSpec((None, tk, dk),
                                  lambda b, h, i, j: (b * H + h, j, 0))
            qkv_args = (q_t, k_t, v_t)
        out = _attention_pallas_call(
            bias_args + qkv_args,
            list(bias_specs) + [q_spec, k_spec, v_spec],
            jax.ShapeDtypeStruct((B * H, S, dk), jnp.bfloat16),
            pl.BlockSpec((None, tq, dk), lambda b, h, i, j: (b * H + h, i, 0)),
            grid, kernel, tq, dk)
        return (out.reshape(B, H, S, dk).transpose(0, 2, 1, 3)
                   .reshape(B, S, H * dk))

    if _HEAD_SLICED_LAYOUT_OK:
        try:
            return head_sliced_call()
        except Exception:
            _HEAD_SLICED_LAYOUT_OK = False
    return transposed_call()


# ----------------------------- Module wrapper --------------------------------
class MultiHeadedAttention:
    def __init__(self, h, d_model, key, dropout=0.1):
        assert d_model % h == 0
        self.d_k = d_model // h
        self.h = h
        self.d_model = d_model
        self.attn = None
        self.dropout_p = dropout  # inference-mode identity

        # 4 Linear(d_model, d_model) layers; PyTorch-style uniform init.
        bound = 1.0 / math.sqrt(d_model)
        keys = jax.random.split(key, 8)
        self.linears = []          # f32 master copies (used by the reference)
        for i in range(4):
            w = jax.random.uniform(keys[2 * i], (d_model, d_model),
                                   minval=-bound, maxval=bound, dtype=jnp.float32)
            b = jax.random.uniform(keys[2 * i + 1], (d_model,),
                                   minval=-bound, maxval=bound, dtype=jnp.float32)
            self.linears.append((w, b))

        # Fold 1/sqrt(d_k) into the Q projection (no in-kernel score scaling)
        # and pre-cast all projection weights to bf16 so the matmul kernels
        # stream half the weight bytes from HBM.  Biases stay f32 (added to
        # the f32 accumulator at finalize).
        scale = 1.0 / math.sqrt(self.d_k)
        (wq, bq), (wk, bk), (wv, bv), (wo, bo) = self.linears
        self.wq_bf = (wq * scale).astype(jnp.bfloat16)
        self.bq_s = bq * scale
        self.wk_bf, self.bk = wk.astype(jnp.bfloat16), bk
        self.wv_bf, self.bv = wv.astype(jnp.bfloat16), bv
        self.wo_bf, self.bo = wo.astype(jnp.bfloat16), bo
        # Fused QKV weights for true self-attention (input read once).
        self.w_qkv_bf = jnp.concatenate([self.wq_bf, self.wk_bf, self.wv_bf],
                                        axis=1)                    # (D, 3D)
        self.b_qkv = jnp.concatenate([self.bq_s, bk, bv], axis=0)  # (3D,)
        # TODO(synk): optional fp8 weights (with per-channel scales) on v7x.

    def __call__(self, query, key, value, mask=None):
        B, S, D = query.shape
        H, dk = self.h, self.d_k

        if mask is None:
            bias = None                          # specialized no-bias kernel
        else:
            # torch: mask.unsqueeze(1); key-padding mask (B, S).  Finite -1e30
            # instead of -inf avoids the (-inf)-(-inf)=NaN hazard; fully
            # masked rows return a uniform average instead of NaN.
            bias = jnp.where(mask.reshape(B, 1, S) == 0,
                             jnp.float32(-1e30), jnp.float32(0.0))
            # TODO(synk): general (B, S_q, S_k) masks (e.g. causal) are not
            # representable by this key-only bias.

        if (query is key) and (key is value):
            # Self-attention: single fused (D, 3D) projection; the attention
            # kernel indexes the (B, S, 3, H, dk) output in place.
            qkv = pallas_linear(query.reshape(B * S, D), self.w_qkv_bf,
                                self.b_qkv, out_dtype=jnp.bfloat16)  # (N, 3D)
            ctx = pallas_mha_attention(bias, qkv=qkv.reshape(B, S, 3, H, dk))
        else:
            # Cross-attention: separate projections; (N, D) -> (B, S, H, dk)
            # is a free reshape (no transpose, no stack).
            q2d = pallas_linear(query.reshape(B * S, D), self.wq_bf, self.bq_s,
                                out_dtype=jnp.bfloat16)
            k2d = pallas_linear(key.reshape(B * S, D), self.wk_bf, self.bk,
                                out_dtype=jnp.bfloat16)
            v2d = pallas_linear(value.reshape(B * S, D), self.wv_bf, self.bv,
                                out_dtype=jnp.bfloat16)
            ctx = pallas_mha_attention(bias,
                                       q=q2d.reshape(B, S, H, dk),
                                       k=k2d.reshape(B, S, H, dk),
                                       v=v2d.reshape(B, S, H, dk))

        self.attn = None
        # TODO(synk): p_attn is not materialized (flash kernel keeps only the
        # running softmax statistics); dropout on p_attn is identity at eval.

        out = pallas_linear(ctx.reshape(B * S, D), self.wo_bf, self.bo,
                            out_dtype=jnp.float32)
        return out.reshape(B, S, D)


# ------------------------------ Reference ------------------------------------
def _reference(mha, query, key, value, mask=None):
    def lin(x, wb):
        w, b = wb
        return x @ w + b
    B, S, D = query.shape
    h, d_k = mha.h, mha.d_k
    q = lin(query, mha.linears[0]).reshape(B, S, h, d_k).transpose(0, 2, 1, 3)
    k = lin(key, mha.linears[1]).reshape(B, S, h, d_k).transpose(0, 2, 1, 3)
    v = lin(value, mha.linears[2]).reshape(B, S, h, d_k).transpose(0, 2, 1, 3)
    scores = jnp.einsum("bhqd,bhkd->bhqk", q, k) / math.sqrt(d_k)
    if mask is not None:
        m = mask.reshape(B, 1, 1, S)
        scores = jnp.where(m == 0, -jnp.inf, scores)
    p = jax.nn.softmax(scores, axis=-1)
    x = jnp.einsum("bhqk,bhkd->bhqd", p, v)
    x = x.transpose(0, 2, 1, 3).reshape(B, S, h * d_k)
    return lin(x, mha.linears[3])


# -------------------------------- Main ---------------------------------------
if __name__ == "__main__":
    B, S, d_model, h = 2, 8, 32, 4

    root = jax.random.PRNGKey(0)
    k_params, k_q, k_k, k_v = jax.random.split(root, 4)

    mha = MultiHeadedAttention(h, d_model, k_params)

    query = jax.random.normal(k_q, (B, S, d_model), dtype=jnp.float32)
    key = jax.random.normal(k_k, (B, S, d_model), dtype=jnp.float32)
    value = jax.random.normal(k_v, (B, S, d_model), dtype=jnp.float32)

    # Cross-attention-style call (distinct q/k/v), no mask.
    out = jax.block_until_ready(mha(query, key, value, mask=None))
    ref = _reference(mha, query, key, value, mask=None)
    assert out.shape == (B, S, d_model)
    assert jnp.allclose(out, ref, atol=5e-2, rtol=5e-2), "mismatch (unmasked)"

    # Key-padding mask path.
    mask = jnp.ones((B, S), dtype=jnp.int32).at[1, 5:].set(0)
    out_m = jax.block_until_ready(mha(query, key, value, mask=mask))
    ref_m = _reference(mha, query, key, value, mask=mask)
    assert jnp.allclose(out_m, ref_m, atol=5e-2, rtol=5e-2), "mismatch (masked)"

    # Self-attention path exercises the fused QKV projection.
    out_s = jax.block_until_ready(mha(query, query, query, mask=None))
    ref_s = _reference(mha, query, query, query, mask=None)
    assert jnp.allclose(out_s, ref_s, atol=5e-2, rtol=5e-2), "mismatch (self-attn)"

    print("KERNEL_OK")
</pallas_src>

<mosaic_0001>
module attributes {stable_mosaic.version = 11 : i64} {
  func.func @_linear_kernel(%arg0: i32, %arg1: i32, %arg2: i32, %arg3: memref<16x32xf32, #tpu.memory_space<vmem>>, %arg4: memref<32x32xbf16, #tpu.memory_space<vmem>>, %arg5: memref<1x32xf32, #tpu.memory_space<vmem>>, %arg6: memref<16x32xbf16, #tpu.memory_space<vmem>>, %arg7: memref<16x32xf32, #tpu.memory_space<vmem>>) attributes {dimension_semantics = [#tpu.dimension_semantics<parallel>, #tpu.dimension_semantics<parallel>, #tpu.dimension_semantics<arbitrary>], iteration_bounds = array<i64: 1, 1, 1>, scalar_prefetch = 0 : i64, scratch_operands = 1 : i64, tpu.core_type = #tpu.core_type<tc>, window_params = [{transform_indices = @transform_0, window_bounds = array<i64: 16, 32>}, {transform_indices = @transform_1, window_bounds = array<i64: 32, 32>}, {transform_indices = @transform_2, window_bounds = array<i64: 1, 32>}, {transform_indices = @transform_3, window_bounds = array<i64: 16, 32>}]} {
    %c0_i32 = arith.constant 0 : i32
    %0 = arith.cmpi eq, %arg2, %c0_i32 : i32
    %1 = arith.extui %0 : i1 to i32
    %c0_i32_0 = arith.constant 0 : i32
    %2 = arith.cmpi ne, %1, %c0_i32_0 : i32
    scf.if %2 {
      %cst_10 = arith.constant 0.000000e+00 : f32
      %13 = vector.broadcast %cst_10 : f32 to vector<16x32xf32>
      %c0_11 = arith.constant 0 : index
      %c0_12 = arith.constant 0 : index
      %14 = vector.load %arg7[%c0_11, %c0_12] : memref<16x32xf32, #tpu.memory_space<vmem>>, vector<16x32xf32>
      tpu.vector_store %arg7[%c0_11, %c0_12], %13 {strides = array<i32>} : memref<16x32xf32, #tpu.memory_space<vmem>>, vector<16x32xf32>,
    } else {
    }
    %c0 = arith.constant 0 : index
    %c0_1 = arith.constant 0 : index
    %3 = vector.load %arg7[%c0, %c0_1] : memref<16x32xf32, #tpu.memory_space<vmem>>, vector<16x32xf32>
    %c0_2 = arith.constant 0 : index
    %c0_3 = arith.constant 0 : index
    %4 = vector.load %arg3[%c0_2, %c0_3] : memref<16x32xf32, #tpu.memory_space<vmem>>, vector<16x32xf32>
    %5 = arith.truncf %4 : vector<16x32xf32> to vector<16x32xbf16>
    %c0_4 = arith.constant 0 : index
    %c0_5 = arith.constant 0 : index
    %6 = vector.load %arg4[%c0_4, %c0_5] : memref<32x32xbf16, #tpu.memory_space<vmem>>, vector<32x32xbf16>
    %cst = arith.constant dense<0.000000e+00> : vector<16x32xf32>
    %7 = tpu.matmul %5, %6, %cst {dimension_numbers = #tpu.dot_dimension_numbers<[1], [0], [0], [1], [0, 0, 1, 1], [], []>} : vector<16x32xbf16>, vector<32x32xbf16>, vector<16x32xf32> -> vector<16x32xf32>
    %8 = arith.addf %3, %7 : vector<16x32xf32>
    %c0_6 = arith.constant 0 : index
    %c0_7 = arith.constant 0 : index
    %9 = vector.load %arg7[%c0_6, %c0_7] : memref<16x32xf32, #tpu.memory_space<vmem>>, vector<16x32xf32>
    tpu.vector_store %arg7[%c0_6, %c0_7], %8 {strides = array<i32>} : memref<16x32xf32, #tpu.memory_space<vmem>>, vector<16x32xf32>,
    %c0_i32_8 = arith.constant 0 : i32
    %10 = arith.cmpi eq, %arg2, %c0_i32_8 : i32
    %11 = arith.extui %10 : i1 to i32
    %c0_i32_9 = arith.constant 0 : i32
    %12 = arith.cmpi ne, %11, %c0_i32_9 : i32
    scf.if %12 {
      %c0_10 = arith.constant 0 : index
      %c0_11 = arith.constant 0 : index
      %13 = vector.load %arg7[%c0_10, %c0_11] : memref<16x32xf32, #tpu.memory_space<vmem>>, vector<16x32xf32>
      %c0_12 = arith.constant 0 : index
      %c0_13 = arith.constant 0 : index
      %14 = vector.load %arg5[%c0_12, %c0_13] : memref<1x32xf32, #tpu.memory_space<vmem>>, vector<1x32xf32>
      %15 = vector.broadcast %14 : vector<1x32xf32> to vector<16x32xf32>
      %16 = arith.addf %13, %15 : vector<16x32xf32>
      %17 = arith.truncf %16 : vector<16x32xf32> to vector<16x32xbf16>
      %c0_14 = arith.constant 0 : index
      %c0_15 = arith.constant 0 : index
      %18 = vector.load %arg6[%c0_14, %c0_15] : memref<16x32xbf16, #tpu.memory_space<vmem>>, vector<16x32xbf16>
      tpu.vector_store %arg6[%c0_14, %c0_15], %17 {strides = array<i32>} : memref<16x32xbf16, #tpu.memory_space<vmem>>, vector<16x32xbf16>,
    } else {
    }
    return
  }
  func.func @transform_0(%arg0: i32, %arg1: i32, %arg2: i32) -> (i32, i32) {
    %c0_i32 = arith.constant 0 : i32
    return %arg0, %arg2 : i32, i32
  }
  func.func @transform_1(%arg0: i32, %arg1: i32, %arg2: i32) -> (i32, i32) {
    %c0_i32 = arith.constant 0 : i32
    return %arg2, %arg1 : i32, i32
  }
  func.func @transform_2(%arg0: i32, %arg1: i32, %arg2: i32) -> (i32, i32) {
    %c0_i32 = arith.constant 0 : i32
    %c0_i32_0 = arith.constant 0 : i32
    return %c0_i32, %arg1 : i32, i32
  }
  func.func @transform_3(%arg0: i32, %arg1: i32, %arg2: i32) -> (i32, i32) {
    %c0_i32 = arith.constant 0 : i32
    return %arg0, %arg1 : i32, i32
  }
}

</mosaic_0001>

<llo_original>
// kernel: tpu_custom_call.1
$region0: #{tpu_custom_call.1}
  #allocation0 [shape = 'u32[]', space=smem, size = 0x4, offset = 0x4, fixed_abs, tag = 'smem constant byte address 0x4 - core index']
  #allocation1 [shape = 'u32[72,128]{1,0:T(1,128)}', space=vmem, size = 0x9000, scoped, tag = 'internal scratch']
  #allocation2 [shape = 'f32[16,32]{1,0:T(8,128)}', space=vmem, size = 0x2000, scoped, tag = 'scratch operand']
  %s0 = inlined_call_operand.hbm [shape: f32[16,32], index: 0, kind: input, shape index: {}]
  %s1 = inlined_call_operand.hbm [shape: bf16[32,32], index: 1, kind: input, shape index: {}]
  %s2 = inlined_call_operand.vmem [shape: f32[1,32], index: 2, kind: input, shape index: {}]
  %s3 = inlined_call_operand.hbm [shape: bf16[16,32], index: 3, kind: output, shape index: {}]
  %s4 = sld [smem:[#allocation0]]
  $region38: #{tpu_custom_call.1} parent=0
    _
  %s6 = ssub.s32 1, %s4
  %s7 = scalar_select 0, %s6, %s4
  $region1: #{tpu_custom_call.1} parent=0
    #allocation3 [shape = 'u8[8192]{0}', space=vmem, size = 0x2000, scoped, tag = 'input window, operand 0, single buffered']
    #allocation4 [shape = 's32[1]{0}', space=sflag, size = 0x4, scoped, tag = 'scoped memory for tpu_custom_call.1']
    #allocation5 [shape = 's32[1]{0}', space=sflag, size = 0x4, scoped, tag = 'scoped memory for tpu_custom_call.1']
    #allocation6 [shape = 'u8[8192]{0}', space=vmem, size = 0x2000, scoped, tag = 'input window, operand 1, single buffered']
    #allocation7 [shape = 's32[1]{0}', space=sflag, size = 0x4, scoped, tag = 'scoped memory for tpu_custom_call.1']
    #allocation8 [shape = 'u8[4096]{0}', space=vmem, size = 0x1000, scoped, tag = 'output window, operand 0, single buffered']
    %8 = vsyncpa [#allocation4], 0
    %9 = vsyncpa [#allocation7], 0
    %10 = vsyncpa [#allocation5], 0
    // Predicated region
    $region2: #{tpu_custom_call.1} parent=1 // pred_check
      _
    $region3: #{tpu_custom_call.1} parent=1 // pred_check_branch
      %12 = sbr.rel (0) target = $region5
    $region4: #{tpu_custom_call.1} parent=1 // pred_region
      %14 = vsyncadd [#allocation4], 0
      %s15 = sshll.u32 %s0, 4
      %s16 = int_to_ptr.hbm [resolvable:$true] %s15
      %s17 = sshll.u32 [#allocation3], 4
      %s18 = int_to_ptr.vmem [resolvable:$true] %s17
      %23 = dma.hbm_to_vmem [thread:$0]  %s16, 256, %s18, [#allocation4], 128, 128, 8
    $region5: #{tpu_custom_call.1} parent=1 // pred_fallthru
      _
    // Predicated region
    $region6: #{tpu_custom_call.1} parent=1 // pred_check
      _
    $region7: #{tpu_custom_call.1} parent=1 // pred_check_branch
      %25 = sbr.rel (0) target = $region9
    $region8: #{tpu_custom_call.1} parent=1 // pred_region
      %27 = vsyncadd [#allocation7], 0
      %s28 = sshll.u32 %s1, 4
      %s29 = int_to_ptr.hbm [resolvable:$true] %s28
      %s30 = sshll.u32 [#allocation6], 4
      %s31 = int_to_ptr.vmem [resolvable:$true] %s30
      %36 = dma.hbm_to_vmem [thread:$0]  %s29, 256, %s31, [#allocation7], 64, 64, 4
    $region9: #{tpu_custom_call.1} parent=1 // pred_fallthru
      _
    // Predicated region
    $region10: #{tpu_custom_call.1} parent=1 // pred_check
      _
    $region11: #{tpu_custom_call.1} parent=1 // pred_check_branch
      %38 = sbr.rel (0) target = $region13
    $region12: #{tpu_custom_call.1} parent=1 // pred_region
      _
    $region13: #{tpu_custom_call.1} parent=1 // pred_fallthru
      _
    // Predicated region
    $region14: #{tpu_custom_call.1} parent=1 // pred_check
      _
    $region15: #{tpu_custom_call.1} parent=1 // pred_check_branch
      %40 = sbr.rel (0) target = $region17
    $region16: #{tpu_custom_call.1} parent=1 // pred_region
      %42 = dma.done [#allocation4], 256
    $region17: #{tpu_custom_call.1} parent=1 // pred_fallthru
      _
    // Predicated region
    $region18: #{tpu_custom_call.1} parent=1 // pred_check
      _
    $region19: #{tpu_custom_call.1} parent=1 // pred_check_branch
      %44 = sbr.rel (0) target = $region21
    $region20: #{tpu_custom_call.1} parent=1 // pred_region
      %46 = dma.done [#allocation7], 256
    $region21: #{tpu_custom_call.1} parent=1 // pred_fallthru
      _
    %p48 = scmp.eq.s32.totalorder 0, 0
    // Predicated region
    $region22: #{tpu_custom_call.1} parent=1 // pred_check
      %p49 = pneg %p48
    $region23: #{tpu_custom_call.1} parent=1 // pred_check_branch
      %51 = sbr.rel (%p49) target = $region25
    $region24: #{tpu_custom_call.1} parent=1 // pred_region
      %vm52 = vcmask 261120
      %53 = vst.msk [vmem:[#allocation2] sm:$0xff] %vm52, 0.0
      %54 = vst.msk [vmem:[#allocation2 + $0x8] sm:$0xff] %vm52, 0.0
    $region25: #{tpu_custom_call.1} parent=1 // pred_fallthru
      _
    %v55 = vld [vmem:[#allocation2] sm:$0xff]
    %v56 = vld [vmem:[#allocation2 + $0x8] sm:$0xff]
    %v57 = vld [vmem:[#allocation3] sm:$0xff]
    %v58 = vld [vmem:[#allocation3 + $0x8] sm:$0xff]
    %v59 = vpack.c.bf16 %v58, %v57
    %v60 = vld [vmem:[#allocation6] sm:$0xf]
    %v61 = vld [vmem:[#allocation6 + $0x4] sm:$0xf]
    %v62 = vld [vmem:[#allocation6 + $0x8] sm:$0xf]
    %v63 = vld [vmem:[#allocation6 + $0xc] sm:$0xf]
    %v68 = vunpack.c.l.b16 %v60
    %v69 = vunpack.c.l.b16 %v61
    %v70 = vunpack.c.l.b16 %v62
    %v71 = vunpack.c.l.b16 %v63
    %v72 = vpack.c.b16 %v69, %v68
    %v73 = vpack.c.b16 %v71, %v70
    %vm76 = vcmask 261120
    %v78 = vsel %vm76, %v59, 0
    %80 = vmatpush.bf16.msra.mxu0 0
    %81 = vmatpush.bf16.msra.mxu0 0
    %82 = vmatpush.bf16.msra.mxu0 0
    %83 = vmatpush.bf16.msra.mxu0 0
    %84 = vmatpush.bf16.msra.mxu0 0
    %85 = vmatpush.bf16.msra.mxu0 0
    %86 = vmatpush.bf16.msra.mxu0 %v73
    %87 = vmatpush.bf16.msra.mxu0 %v72
    %88 = vmatmul.bf16.gmra.mxu0 %v78
    %v89 = vpop.f32.mrf.mxu0
    %v90 = vadd.f32 0.0, %v89
    %v91 = vpop.f32.mrf.mxu0
    %v92 = vadd.f32 0.0, %v91
    %93 = vdwg.mxu0
    %v94 = vadd.f32 %v55, %v90
    %v95 = vadd.f32 %v56, %v92
    %96 = vst.msk [vmem:[#allocation2] sm:$0xff] %vm76, %v94
    %97 = vst.msk [vmem:[#allocation2 + $0x8] sm:$0xff] %vm76, %v95
    // Predicated region
    $region26: #{tpu_custom_call.1} parent=1 // pred_check
      %p98 = pneg %p48
    $region27: #{tpu_custom_call.1} parent=1 // pred_check_branch
      %100 = sbr.rel (%p98) target = $region29
    $region28: #{tpu_custom_call.1} parent=1 // pred_region
      %v101 = vld [vmem:[#allocation2] sm:$0xff]
      %v102 = vld [vmem:[#allocation2 + $0x8] sm:$0xff]
      %v103 = vld [vmem:[%s2] sm:$0x1]
      %v105 = vperm.slane %v103, 0
      %v107 = vadd.f32 %v101, %v105
      %v108 = vadd.f32 %v102, %v105
      %v109 = vpack.c.bf16 %v107, %v107
      %v110 = vpack.c.bf16 %v108, %v108
      %vm111 = vcmask 257024
      %112 = vst.msk [vmem:[#allocation8] sm:$0xf] %vm111, %v109
      %113 = vst.msk [vmem:[#allocation8 + $0x4] sm:$0xf] %vm111, %v110
    $region29: #{tpu_custom_call.1} parent=1 // pred_fallthru
      _
    // Predicated region
    $region30: #{tpu_custom_call.1} parent=1 // pred_check
      _
    $region31: #{tpu_custom_call.1} parent=1 // pred_check_branch
      %115 = sbr.rel (0) target = $region33
    $region32: #{tpu_custom_call.1} parent=1 // pred_region
      %117 = vsyncadd [#allocation5], 0
      %s118 = sshll.u32 [#allocation8], 4
      %s119 = int_to_ptr.vmem [resolvable:$true] %s118
      %s120 = sshll.u32 %s3, 4
      %s121 = int_to_ptr.hbm [resolvable:$true] %s120
      %126 = dma.vmem_to_hbm [thread:$0]  %s119, 128, %s121, [#allocation5], 64, 64, 4
    $region33: #{tpu_custom_call.1} parent=1 // pred_fallthru
      _
    // Predicated region
    $region34: #{tpu_custom_call.1} parent=1 // pred_check
      _
    $region35: #{tpu_custom_call.1} parent=1 // pred_check_branch
      %128 = sbr.rel (0) target = $region37
    $region36: #{tpu_custom_call.1} parent=1 // pred_region
      %130 = dma.done [#allocation5], 128
    $region37: #{tpu_custom_call.1} parent=1 // pred_fallthru
      _
    %131 = vsyncpa [#allocation4], 1
    %132 = vsyncpa [#allocation7], 1
    %133 = vsyncpa [#allocation5], 1

</llo_original>
